<compile_context>
chip_gen: v5e
topology: v5e:2x2
jax: 0.10.0
libtpu: 0.0.40
codegen_flags: <defaults>
</compile_context>

<pallas_src>
import functools

import jax
import jax.numpy as jnp
from jax.experimental import pallas as pl
from jax.experimental.pallas import tpu as pltpu

_SMOOTH = 1e-9                      # matches the PyTorch module
_BASE_TN = 4096                     # baseline lane tile (multiple of 128)
_TARGET_STEP_BYTES = 2 * 1024 * 1024   # ~2 MiB of input DMA per grid step
_VMEM_CAP_BYTES = 10 * 1024 * 1024     # pipeline-buffer budget (v7x-safe)


def _round_up(x, m):
    return ((x + m - 1) // m) * m


def _logcosh_dice_kernel(pred_ref, true_ref, o_ref, inter_acc, sum_acc,
                         *, hw, tn, needs_mask):
    """Grid = (batch_blocks, hw_tiles). Emits per-batch-block channel partials."""
    k = pl.program_id(1)
    last_k = pl.num_programs(1) - 1

    @pl.when(k == 0)
    def _():
        inter_acc[...] = jnp.zeros_like(inter_acc)
        sum_acc[...] = jnp.zeros_like(sum_acc)

    p = pred_ref[...].astype(jnp.float32)   # (TB, C, TN)
    t = true_ref[...].astype(jnp.float32)   # (TB, C, TN)

    def accumulate(pp, tt):
        # Pure VPU work (elementwise mul/add + add over the TB axis), hidden
        # under the DMA stream.  Accumulators stay lane-dense: (C, TN) f32.
        inter_acc[...] += jnp.sum(pp * tt, axis=0)
        sum_acc[...] += jnp.sum(pp + tt, axis=0)

    if needs_mask:
        # Only the last HW tile can run past the row; mask only there.
        @pl.when(k == last_k)
        def _():
            lane = jax.lax.broadcasted_iota(jnp.int32, p.shape, 2) + k * tn
            valid = lane < hw
            accumulate(jnp.where(valid, p, 0.0), jnp.where(valid, t, 0.0))

        @pl.when(k != last_k)
        def _():
            accumulate(p, t)
    else:
        accumulate(p, t)

    @pl.when(k == last_k)
    def _():
        # Single cross-lane reduce per batch block; write (C, 2) partials:
        # lane 0 = intersection, lane 1 = sum(pred) + sum(true).
        o_ref[0, :, 0:1] = jnp.sum(inter_acc[...], axis=1, keepdims=True)
        o_ref[0, :, 1:2] = jnp.sum(sum_acc[...], axis=1, keepdims=True)


def _choose_tiles(B, C, HW, bytes_per_elem_both):
    """Pick (TB, TN) targeting ~2 MiB/step under a v7x-safe VMEM budget."""
    c_pad = _round_up(C, 8)                    # sublane padding (f32 granule)
    hw_pad = _round_up(HW, 128)

    def buf_bytes(tb, tn):
        # 2 inputs x double-buffered (TB, c_pad, TN) blocks + 2 f32 accumulators.
        return 2 * tb * c_pad * tn * bytes_per_elem_both + 2 * c_pad * tn * 4

    tn = min(_BASE_TN, hw_pad)

    # Batch rows per step: hit the byte target, stay under VMEM, divide B.
    per_b_bytes = C * tn * bytes_per_elem_both
    tb_target = max(1, min(B, _TARGET_STEP_BYTES // max(1, per_b_bytes)))
    while tb_target > 1 and buf_bytes(tb_target, tn) > _VMEM_CAP_BYTES:
        tb_target = max(1, tb_target // 2)
    tb = max(d for d in range(1, B + 1) if B % d == 0 and d <= tb_target)

    # If the whole batch already fits in one block and we are still short of
    # the byte target (small B / C), widen the lane tile instead.
    while (tb == B and tn < hw_pad
           and tb * C * tn * bytes_per_elem_both < _TARGET_STEP_BYTES
           and buf_bytes(tb, tn * 2) <= _VMEM_CAP_BYTES):
        tn *= 2
    tn = min(tn, hw_pad)
    return tb, tn


def logcosh_dice_loss(output, y_true):
    """output, y_true: NCHW float arrays (f32 or bf16 / narrow labels).

    Returns scalar f32 loss.  pred is expected to be non-negative (e.g.
    post-sigmoid), matching the reference module's usage, so dsc is bounded
    in [0, 1] and the direct log((e^x + e^-x)/2) form cannot overflow.
    Narrow input dtypes (bf16 activations, bf16/int8-as-float labels) are
    streamed as-is and cast to f32 in-kernel — do not pre-cast in the caller.
    """
    B, C, H, W = output.shape
    HW = H * W

    # Contiguous reshapes — no data movement, no HBM transpose.
    pred = output.reshape(B, C, HW)
    true = y_true.reshape(B, C, HW)

    bytes_per_elem_both = pred.dtype.itemsize + true.dtype.itemsize
    TB, TN = _choose_tiles(B, C, HW, bytes_per_elem_both)
    nb = B // TB
    num_tiles = pl.cdiv(HW, TN)
    needs_mask = (HW % TN) != 0

    kernel = functools.partial(
        _logcosh_dice_kernel, hw=HW, tn=TN, needs_mask=needs_mask)

    # Per-batch-block partials: [..., 0] = intersection_c, [..., 1] = denom_c.
    partials = pl.pallas_call(
        kernel,
        out_shape=jax.ShapeDtypeStruct((nb, C, 2), jnp.float32),
        grid_spec=pltpu.PrefetchScalarGridSpec(
            num_scalar_prefetch=0,
            grid=(nb, num_tiles),
            in_specs=[
                pl.BlockSpec((TB, C, TN), lambda b, k: (b, 0, k)),
                pl.BlockSpec((TB, C, TN), lambda b, k: (b, 0, k)),
            ],
            out_specs=pl.BlockSpec((1, C, 2), lambda b, k: (b, 0, 0)),
            scratch_shapes=[
                pltpu.VMEM((C, TN), jnp.float32),   # per-lane intersection
                pltpu.VMEM((C, TN), jnp.float32),   # per-lane (pred + true)
            ],
        ),
        compiler_params=pltpu.CompilerParams(
            dimension_semantics=("parallel", "arbitrary")),
    )(pred, true)

    # Tiny epilogue in plain JAX: combine batch-block partials, dice, log-cosh.
    inter = jnp.sum(partials[:, :, 0], axis=0)   # (C,)
    denom = jnp.sum(partials[:, :, 1], axis=0)   # (C,)
    dsc = 1.0 - (2.0 * inter + _SMOOTH) / (denom + _SMOOTH)
    logcosh = jnp.log((jnp.exp(dsc) + jnp.exp(-dsc)) * 0.5)
    return jnp.sum(logcosh) / C


def _logcosh_dice_loss_ref(output, y_true):
    """Pure-JAX reference mirroring the PyTorch loop."""
    C = output.shape[1]
    loss = 0.0
    for c in range(C):
        p = output[:, c].reshape(-1).astype(jnp.float32)
        t = y_true[:, c].reshape(-1).astype(jnp.float32)
        inter = jnp.sum(p * t)
        dsc = 1.0 - (2.0 * inter + _SMOOTH) / (jnp.sum(p) + jnp.sum(t) + _SMOOTH)
        loss += jnp.log((jnp.exp(dsc) + jnp.exp(-dsc)) / 2.0)
    return loss / C


if __name__ == "__main__":
    key = jax.random.PRNGKey(0)
    k1, k2 = jax.random.split(key)
    B, C, H, W = 2, 4, 16, 16
    # predictions in [0, 1] (e.g. post-sigmoid), binary ground truth
    output = jax.nn.sigmoid(jax.random.normal(k1, (B, C, H, W), dtype=jnp.float32))
    y_true = (jax.random.uniform(k2, (B, C, H, W)) > 0.5).astype(jnp.float32)

    loss = jax.block_until_ready(logcosh_dice_loss(output, y_true))
    ref = jax.block_until_ready(_logcosh_dice_loss_ref(output, y_true))
    assert jnp.allclose(loss, ref, rtol=1e-5, atol=1e-6), (loss, ref)
    print("KERNEL_OK")
</pallas_src>

<mosaic_0001>
module attributes {stable_mosaic.version = 11 : i64} {
  func.func @_logcosh_dice_kernel(%arg0: i32, %arg1: i32, %arg2: memref<2x4x256xf32, #tpu.memory_space<vmem>>, %arg3: memref<2x4x256xf32, #tpu.memory_space<vmem>>, %arg4: memref<1x4x2xf32, #tpu.memory_space<vmem>>, %arg5: memref<4x256xf32, #tpu.memory_space<vmem>>, %arg6: memref<4x256xf32, #tpu.memory_space<vmem>>) attributes {dimension_semantics = [#tpu.dimension_semantics<parallel>, #tpu.dimension_semantics<arbitrary>], iteration_bounds = array<i64: 1, 1>, scalar_prefetch = 0 : i64, scratch_operands = 2 : i64, tpu.core_type = #tpu.core_type<tc>, window_params = [{transform_indices = @transform_0, window_bounds = array<i64: 2, 4, 256>}, {transform_indices = @transform_1, window_bounds = array<i64: 2, 4, 256>}, {transform_indices = @transform_2, window_bounds = array<i64: 1, 4, 2>}]} {
    %c0_i32 = arith.constant 0 : i32
    %0 = arith.cmpi eq, %arg1, %c0_i32 : i32
    %1 = arith.extui %0 : i1 to i32
    %c0_i32_0 = arith.constant 0 : i32
    %2 = arith.cmpi ne, %1, %c0_i32_0 : i32
    scf.if %2 {
      %cst_17 = arith.constant 0.000000e+00 : f32
      %18 = vector.broadcast %cst_17 : f32 to vector<4x256xf32>
      %c0_18 = arith.constant 0 : index
      %c0_19 = arith.constant 0 : index
      %19 = vector.load %arg5[%c0_18, %c0_19] : memref<4x256xf32, #tpu.memory_space<vmem>>, vector<4x256xf32>
      tpu.vector_store %arg5[%c0_18, %c0_19], %18 {strides = array<i32>} : memref<4x256xf32, #tpu.memory_space<vmem>>, vector<4x256xf32>,
      %cst_20 = arith.constant 0.000000e+00 : f32
      %20 = vector.broadcast %cst_20 : f32 to vector<4x256xf32>
      %c0_21 = arith.constant 0 : index
      %c0_22 = arith.constant 0 : index
      %21 = vector.load %arg6[%c0_21, %c0_22] : memref<4x256xf32, #tpu.memory_space<vmem>>, vector<4x256xf32>
      tpu.vector_store %arg6[%c0_21, %c0_22], %20 {strides = array<i32>} : memref<4x256xf32, #tpu.memory_space<vmem>>, vector<4x256xf32>,
    } else {
    }
    %c0 = arith.constant 0 : index
    %c0_1 = arith.constant 0 : index
    %c0_2 = arith.constant 0 : index
    %3 = vector.load %arg2[%c0, %c0_1, %c0_2] : memref<2x4x256xf32, #tpu.memory_space<vmem>>, vector<2x4x256xf32>
    %c0_3 = arith.constant 0 : index
    %c0_4 = arith.constant 0 : index
    %c0_5 = arith.constant 0 : index
    %4 = vector.load %arg3[%c0_3, %c0_4, %c0_5] : memref<2x4x256xf32, #tpu.memory_space<vmem>>, vector<2x4x256xf32>
    %c0_6 = arith.constant 0 : index
    %c0_7 = arith.constant 0 : index
    %5 = vector.load %arg5[%c0_6, %c0_7] : memref<4x256xf32, #tpu.memory_space<vmem>>, vector<4x256xf32>
    %6 = arith.mulf %3, %4 : vector<2x4x256xf32>
    %cst = arith.constant dense<0.000000e+00> : vector<4x256xf32>
    %7 = vector.multi_reduction <add>, %6, %cst [0] : vector<2x4x256xf32> to vector<4x256xf32>
    %8 = arith.addf %5, %7 : vector<4x256xf32>
    %c0_8 = arith.constant 0 : index
    %c0_9 = arith.constant 0 : index
    %9 = vector.load %arg5[%c0_8, %c0_9] : memref<4x256xf32, #tpu.memory_space<vmem>>, vector<4x256xf32>
    tpu.vector_store %arg5[%c0_8, %c0_9], %8 {strides = array<i32>} : memref<4x256xf32, #tpu.memory_space<vmem>>, vector<4x256xf32>,
    %c0_10 = arith.constant 0 : index
    %c0_11 = arith.constant 0 : index
    %10 = vector.load %arg6[%c0_10, %c0_11] : memref<4x256xf32, #tpu.memory_space<vmem>>, vector<4x256xf32>
    %11 = arith.addf %3, %4 : vector<2x4x256xf32>
    %cst_12 = arith.constant dense<0.000000e+00> : vector<4x256xf32>
    %12 = vector.multi_reduction <add>, %11, %cst_12 [0] : vector<2x4x256xf32> to vector<4x256xf32>
    %13 = arith.addf %10, %12 : vector<4x256xf32>
    %c0_13 = arith.constant 0 : index
    %c0_14 = arith.constant 0 : index
    %14 = vector.load %arg6[%c0_13, %c0_14] : memref<4x256xf32, #tpu.memory_space<vmem>>, vector<4x256xf32>
    tpu.vector_store %arg6[%c0_13, %c0_14], %13 {strides = array<i32>} : memref<4x256xf32, #tpu.memory_space<vmem>>, vector<4x256xf32>,
    %c0_i32_15 = arith.constant 0 : i32
    %15 = arith.cmpi eq, %arg1, %c0_i32_15 : i32
    %16 = arith.extui %15 : i1 to i32
    %c0_i32_16 = arith.constant 0 : i32
    %17 = arith.cmpi ne, %16, %c0_i32_16 : i32
    scf.if %17 {
      %c0_17 = arith.constant 0 : index
      %c0_18 = arith.constant 0 : index
      %18 = vector.load %arg5[%c0_17, %c0_18] : memref<4x256xf32, #tpu.memory_space<vmem>>, vector<4x256xf32>
      %cst_19 = arith.constant dense<0.000000e+00> : vector<4xf32>
      %19 = vector.multi_reduction <add>, %18, %cst_19 [1] : vector<4x256xf32> to vector<4xf32>
      %20 = vector.shape_cast %19 : vector<4xf32> to vector<4x1xf32>
      %c0_20 = arith.constant 0 : index
      %c0_21 = arith.constant 0 : index
      %c0_22 = arith.constant 0 : index
      %21 = vector.load %arg4[%c0_20, %c0_21, %c0_22] : memref<1x4x2xf32, #tpu.memory_space<vmem>>, vector<1x4x1xf32>
      %22 = vector.shape_cast %21 : vector<1x4x1xf32> to vector<4x1xf32>
      %23 = vector.shape_cast %20 : vector<4x1xf32> to vector<1x4x1xf32>
      tpu.vector_store %arg4[%c0_20, %c0_21, %c0_22], %23 {strides = array<i32>} : memref<1x4x2xf32, #tpu.memory_space<vmem>>, vector<1x4x1xf32>,
      %c0_23 = arith.constant 0 : index
      %c0_24 = arith.constant 0 : index
      %24 = vector.load %arg6[%c0_23, %c0_24] : memref<4x256xf32, #tpu.memory_space<vmem>>, vector<4x256xf32>
      %cst_25 = arith.constant dense<0.000000e+00> : vector<4xf32>
      %25 = vector.multi_reduction <add>, %24, %cst_25 [1] : vector<4x256xf32> to vector<4xf32>
      %26 = vector.shape_cast %25 : vector<4xf32> to vector<4x1xf32>
      %c0_26 = arith.constant 0 : index
      %c0_27 = arith.constant 0 : index
      %c1 = arith.constant 1 : index
      %27 = vector.load %arg4[%c0_26, %c0_27, %c1] : memref<1x4x2xf32, #tpu.memory_space<vmem>>, vector<1x4x1xf32>
      %28 = vector.shape_cast %27 : vector<1x4x1xf32> to vector<4x1xf32>
      %29 = vector.shape_cast %26 : vector<4x1xf32> to vector<1x4x1xf32>
      tpu.vector_store %arg4[%c0_26, %c0_27, %c1], %29 {strides = array<i32>} : memref<1x4x2xf32, #tpu.memory_space<vmem>>, vector<1x4x1xf32>,
    } else {
    }
    return
  }
  func.func @transform_0(%arg0: i32, %arg1: i32) -> (i32, i32, i32) {
    %c0_i32 = arith.constant 0 : i32
    %c0_i32_0 = arith.constant 0 : i32
    return %arg0, %c0_i32, %arg1 : i32, i32, i32
  }
  func.func @transform_1(%arg0: i32, %arg1: i32) -> (i32, i32, i32) {
    %c0_i32 = arith.constant 0 : i32
    %c0_i32_0 = arith.constant 0 : i32
    return %arg0, %c0_i32, %arg1 : i32, i32, i32
  }
  func.func @transform_2(%arg0: i32, %arg1: i32) -> (i32, i32, i32) {
    %c0_i32 = arith.constant 0 : i32
    %c0_i32_0 = arith.constant 0 : i32
    %c0_i32_1 = arith.constant 0 : i32
    return %arg0, %c0_i32, %c0_i32_0 : i32, i32, i32
  }
}

</mosaic_0001>

<llo_original>
// kernel: tpu_custom_call.1
$region0: #{tpu_custom_call.1}
  #allocation0 [shape = 'u32[]', space=smem, size = 0x4, offset = 0x4, fixed_abs, tag = 'smem constant byte address 0x4 - core index']
  #allocation1 [shape = 'u32[72,128]{1,0:T(1,128)}', space=vmem, size = 0x9000, scoped, tag = 'internal scratch']
  #allocation2 [shape = 'f32[4,256]{1,0:T(4,128)}', space=vmem, size = 0x1000, scoped, tag = 'scratch operand']
  #allocation3 [shape = 'f32[4,256]{1,0:T(4,128)}', space=vmem, size = 0x1000, scoped, tag = 'scratch operand']
  %s0 = inlined_call_operand.hbm [shape: f32[2,4,256], index: 0, kind: input, shape index: {}]
  %s1 = inlined_call_operand.hbm [shape: f32[2,4,256], index: 1, kind: input, shape index: {}]
  %s2 = inlined_call_operand.vmem [shape: f32[1,4,2], index: 2, kind: output, shape index: {}]
  %s3 = sld [smem:[#allocation0]]
  $region34: #{tpu_custom_call.1} parent=0
    _
  %s5 = ssub.s32 1, %s3
  %s6 = scalar_select 0, %s5, %s3
  $region1: #{tpu_custom_call.1} parent=0
    #allocation4 [shape = 'u8[8192]{0}', space=vmem, size = 0x2000, scoped, tag = 'input window, operand 0, single buffered']
    #allocation5 [shape = 's32[1]{0}', space=sflag, size = 0x4, scoped, tag = 'scoped memory for tpu_custom_call.1']
    #allocation6 [shape = 'u8[8192]{0}', space=vmem, size = 0x2000, scoped, tag = 'input window, operand 1, single buffered']
    #allocation7 [shape = 's32[1]{0}', space=sflag, size = 0x4, scoped, tag = 'scoped memory for tpu_custom_call.1']
    %7 = vsyncpa [#allocation5], 0
    %8 = vsyncpa [#allocation7], 0
    // Predicated region
    $region2: #{tpu_custom_call.1} parent=1 // pred_check
      _
    $region3: #{tpu_custom_call.1} parent=1 // pred_check_branch
      %10 = sbr.rel (0) target = $region5
    $region4: #{tpu_custom_call.1} parent=1 // pred_region
      %12 = vsyncadd [#allocation5], 0
      %s13 = sshll.u32 %s0, 4
      %s14 = int_to_ptr.hbm [resolvable:$true] %s13
      %s15 = sshll.u32 [#allocation4], 4
      %s16 = int_to_ptr.vmem [resolvable:$true] %s15
      %21 = dma.hbm_to_vmem [thread:$0]  %s14, 256, %s16, [#allocation5], 128, 128, 8
    $region5: #{tpu_custom_call.1} parent=1 // pred_fallthru
      _
    // Predicated region
    $region6: #{tpu_custom_call.1} parent=1 // pred_check
      _
    $region7: #{tpu_custom_call.1} parent=1 // pred_check_branch
      %23 = sbr.rel (0) target = $region9
    $region8: #{tpu_custom_call.1} parent=1 // pred_region
      %25 = vsyncadd [#allocation7], 0
      %s26 = sshll.u32 %s1, 4
      %s27 = int_to_ptr.hbm [resolvable:$true] %s26
      %s28 = sshll.u32 [#allocation6], 4
      %s29 = int_to_ptr.vmem [resolvable:$true] %s28
      %34 = dma.hbm_to_vmem [thread:$0]  %s27, 256, %s29, [#allocation7], 128, 128, 8
    $region9: #{tpu_custom_call.1} parent=1 // pred_fallthru
      _
    // Predicated region
    $region10: #{tpu_custom_call.1} parent=1 // pred_check
      _
    $region11: #{tpu_custom_call.1} parent=1 // pred_check_branch
      %36 = sbr.rel (0) target = $region13
    $region12: #{tpu_custom_call.1} parent=1 // pred_region
      %38 = dma.done [#allocation5], 256
    $region13: #{tpu_custom_call.1} parent=1 // pred_fallthru
      _
    // Predicated region
    $region14: #{tpu_custom_call.1} parent=1 // pred_check
      _
    $region15: #{tpu_custom_call.1} parent=1 // pred_check_branch
      %40 = sbr.rel (0) target = $region17
    $region16: #{tpu_custom_call.1} parent=1 // pred_region
      %42 = dma.done [#allocation7], 256
    $region17: #{tpu_custom_call.1} parent=1 // pred_fallthru
      _
    %p43 = scmp.eq.s32.totalorder 0, 0
    // Predicated region
    $region18: #{tpu_custom_call.1} parent=1 // pred_check
      %p44 = pneg %p43
    $region19: #{tpu_custom_call.1} parent=1 // pred_check_branch
      %46 = sbr.rel (%p44) target = $region21
    $region20: #{tpu_custom_call.1} parent=1 // pred_region
      %47 = vst [vmem:[#allocation2] sm:$0xff] 0.0
      %48 = vst [vmem:[#allocation3] sm:$0xff] 0.0
    $region21: #{tpu_custom_call.1} parent=1 // pred_fallthru
      _
    %v49 = vld [vmem:[#allocation4] sm:$0xff]
    %v50 = vld [vmem:[#allocation4 + $0x8] sm:$0xff]
    %v51 = vld [vmem:[#allocation6] sm:$0xff]
    %v52 = vld [vmem:[#allocation6 + $0x8] sm:$0xff]
    %v53 = vld [vmem:[#allocation2] sm:$0xff]
    %v54 = vmul.f32 %v49, %v51
    %v55 = vmul.f32 %v50, %v52
    %58 = vst [vmem:[#allocation1] ss:$2 sm:$0xff] %v54
    %v59 = vld.sshfl [vmem:[#allocation1] sm:$0xff pattern:$0x75316420]
    %v60 = vld.sshfl [vmem:[#allocation1 + $0x8] sm:$0xff pattern:$0x75316420]
    %s61 = scalar_lea.vmem [#allocation1], 16
    %62 = vst [vmem:[%s61] ss:$2 sm:$0xff] %v55
    %v63 = vld.sshfl [vmem:[#allocation1 + $0x10] sm:$0xff pattern:$0x75316420]
    %v64 = vld.sshfl [vmem:[#allocation1 + $0x18] sm:$0xff pattern:$0x75316420]
    %vm69 = vcmask 1043456
    %v70 = vsel %vm69, %v59, 0.0
    %v71 = vsel %vm69, %v63, 0.0
    %v72 = vadd.f32 %v70, %v71
    %v73 = vsel %vm69, %v60, 0.0
    %v74 = vsel %vm69, %v64, 0.0
    %v75 = vadd.f32 %v73, %v74
    %v78 = vrot.slane %v75, 4
    %v79 = vsel %vm69, %v72, %v78
    %v81 = vadd.f32 %v53, %v79
    %82 = vst [vmem:[#allocation2] sm:$0xff] %v81
    %v83 = vld [vmem:[#allocation3] sm:$0xff]
    %v84 = vadd.f32 %v49, %v51
    %v85 = vadd.f32 %v50, %v52
    %88 = vst [vmem:[#allocation1] ss:$2 sm:$0xff] %v84
    %v89 = vld.sshfl [vmem:[#allocation1] sm:$0xff pattern:$0x75316420]
    %v90 = vld.sshfl [vmem:[#allocation1 + $0x8] sm:$0xff pattern:$0x75316420]
    %s91 = scalar_lea.vmem [#allocation1], 16
    %92 = vst [vmem:[%s91] ss:$2 sm:$0xff] %v85
    %v93 = vld.sshfl [vmem:[#allocation1 + $0x10] sm:$0xff pattern:$0x75316420]
    %v94 = vld.sshfl [vmem:[#allocation1 + $0x18] sm:$0xff pattern:$0x75316420]
    %v99 = vsel %vm69, %v89, 0.0
    %v100 = vsel %vm69, %v93, 0.0
    %v101 = vadd.f32 %v99, %v100
    %v102 = vsel %vm69, %v90, 0.0
    %v103 = vsel %vm69, %v94, 0.0
    %v104 = vadd.f32 %v102, %v103
    %v107 = vrot.slane %v104, 4
    %v108 = vsel %vm69, %v101, %v107
    %v110 = vadd.f32 %v83, %v108
    %111 = vst [vmem:[#allocation3] sm:$0xff] %v110
    // Predicated region
    $region22: #{tpu_custom_call.1} parent=1 // pred_check
      %p112 = pneg %p43
    $region23: #{tpu_custom_call.1} parent=1 // pred_check_branch
      %114 = sbr.rel (%p112) target = $region25
    $region24: #{tpu_custom_call.1} parent=1 // pred_region
      %v115 = vld [vmem:[#allocation2] sm:$0xff]
      %117 = vst [vmem:[#allocation1] ss:$2 sm:$0xff] %v115
      %v118 = vld.sshfl [vmem:[#allocation1] sm:$0xff pattern:$0x75316420]
      %v119 = vld.sshfl [vmem:[#allocation1 + $0x8] sm:$0xff pattern:$0x75316420]
      %v122 = vsel %vm69, %v118, 0.0
      %v123 = vsel %vm69, %v119, 0.0
      %v124 = vadd.f32 %v122, %v123
      %125 = vadd.xlane.f32.xlu0 %v124
      %v126 = vpop.xlane.xlu0 %125
      %vm127 = vcmask 3072
      %128 = vst.msk [vmem:[%s2] sm:$0xf] %vm127, %v126
      %v129 = vld [vmem:[#allocation3] sm:$0xff]
      %131 = vst [vmem:[#allocation1] ss:$2 sm:$0xff] %v129
      %v132 = vld.sshfl [vmem:[#allocation1] sm:$0xff pattern:$0x75316420]
      %v133 = vld.sshfl [vmem:[#allocation1 + $0x8] sm:$0xff pattern:$0x75316420]
      %v136 = vsel %vm69, %v132, 0.0
      %v137 = vsel %vm69, %v133, 0.0
      %v138 = vadd.f32 %v136, %v137
      %139 = vadd.xlane.f32.xlu0 %v138
      %v140 = vpop.xlane.xlu0 %139
      %vm141 = vcmask 11272
      %142 = vst.msk [vmem:[%s2] sm:$0xf] %vm141, %v140
    $region25: #{tpu_custom_call.1} parent=1 // pred_fallthru
      _
    // Predicated region
    $region26: #{tpu_custom_call.1} parent=1 // pred_check
      _
    $region27: #{tpu_custom_call.1} parent=1 // pred_check_branch
      %144 = sbr.rel (0) target = $region29
    $region28: #{tpu_custom_call.1} parent=1 // pred_region
      _
    $region29: #{tpu_custom_call.1} parent=1 // pred_fallthru
      _
    // Predicated region
    $region30: #{tpu_custom_call.1} parent=1 // pred_check
      _
    $region31: #{tpu_custom_call.1} parent=1 // pred_check_branch
      %146 = sbr.rel (0) target = $region33
    $region32: #{tpu_custom_call.1} parent=1 // pred_region
      _
    $region33: #{tpu_custom_call.1} parent=1 // pred_fallthru
      _
    %147 = vsyncpa [#allocation5], 1
    %148 = vsyncpa [#allocation7], 1

</llo_original>
